<compile_context>
chip_gen: v6e
topology: v6e:2x2x1
jax: 0.10.0
libtpu: 0.0.40
codegen_flags: <defaults>
</compile_context>

<pallas_src>
import functools

import jax
import jax.numpy as jnp
import numpy as np
from jax.experimental import pallas as pl
from jax.experimental.pallas import tpu as pltpu

LN_EPS = 1e-5


def _round_up(x, m):
    return ((x + m - 1) // m) * m


def _tpu_caps():
    """(vmem_capacity_bytes, tensorcores_per_chip) with safe fallbacks."""
    vmem_cap = 64 * 2 ** 20          # conservative default (v7x per-TC VMEM)
    num_cores = 1
    try:
        info = pltpu.get_tpu_info()
        vmem_cap = int(getattr(info, "vmem_capacity_bytes", vmem_cap) or vmem_cap)
        for name in ("num_cores", "core_count", "num_tensorcores",
                     "tensorcores_per_chip"):
            v = getattr(info, name, None)
            if v:
                num_cores = int(v)
                break
    except Exception:
        pass
    return vmem_cap, max(1, num_cores)


def _probe_copy_kernel(x_ref, o_ref):
    o_ref[...] = x_ref[...]


@functools.lru_cache(maxsize=1)
def _single_buffer_constants_supported():
    """Probe (once) whether pl.Buffered(1) is accepted as a BlockSpec
    pipeline_mode.  Only this tiny probe is guarded; the real kernel is never
    executed inside a try/except."""
    if not hasattr(pl, "Buffered"):
        return False
    try:
        spec = pl.BlockSpec((8, 128), lambda i: (0, 0),
                            pipeline_mode=pl.Buffered(1))
        fn = pl.pallas_call(
            _probe_copy_kernel,
            out_shape=jax.ShapeDtypeStruct((8, 128), jnp.float32),
            grid=(1,),
            in_specs=[spec],
            out_specs=pl.BlockSpec((8, 128), lambda i: (0, 0)),
        )
        jax.block_until_ready(fn(jnp.zeros((8, 128), jnp.float32)))
        return True
    except Exception:
        return False


def _layernorm(x, gamma, beta):
    # PyTorch nn.LayerNorm: biased variance, eps inside sqrt, affine.
    mean = jnp.mean(x, axis=-1, keepdims=True)
    var = jnp.mean((x - mean) ** 2, axis=-1, keepdims=True)
    return (x - mean) * jax.lax.rsqrt(var + LN_EPS) * gamma + beta


def _sigmoid_unit_kernel(hidden_num,
                         x0_ref, x1_ref, wx_ref, wstack_ref, vecs_ref, out_ref):
    mm_dtype = wx_ref.dtype            # matmul operand dtype (bf16 or f32)

    x0 = x0_ref[...]                   # (tb, D_in)  streamed at true width
    x1 = x1_ref[...]                   # (tb, D_out)
    vecs = vecs_ref[...].astype(jnp.float32)   # [6 + 3L, D_out] bias/gamma/beta rows

    def layernorm(x, gamma, beta):
        # No padded lanes -> no mask needed; exact nn.LayerNorm math in f32.
        mean = jnp.mean(x, axis=-1, keepdims=True)
        diff = x - mean
        var = jnp.mean(diff * diff, axis=-1, keepdims=True)
        return diff * jax.lax.rsqrt(var + LN_EPS) * gamma + beta

    def affine(act, w, b):
        # MXU matmul at the streamed operand dtype with f32 accumulation.
        return jnp.dot(act.astype(mm_dtype), w,
                       preferred_element_type=jnp.float32) + b

    def sigmoid(x):
        # 1/(1+exp(-x)) == 0.5*tanh(0.5*x)+0.5 : single EUP op, no divide.
        return 0.5 * jnp.tanh(0.5 * x) + 0.5

    # fc_in_x -> ln_in_x ; fc_in_h -> ln_in_h
    hx = layernorm(affine(x0, wx_ref[...], vecs[0:1]), vecs[1:2], vecs[2:3])
    hh = layernorm(affine(x1, wstack_ref[0], vecs[3:4]), vecs[4:5], vecs[5:6])

    residual = hx + hh
    output = sigmoid(residual)

    # hidden layers + fc_out/ln_out (statically unrolled)
    for l in range(hidden_num + 1):
        v = 6 + 3 * l
        y = layernorm(affine(output, wstack_ref[l + 1], vecs[v:v + 1]),
                      vecs[v + 1:v + 2], vecs[v + 2:v + 3])
        residual = residual + y
        if l < hidden_num:
            output = sigmoid(residual)
        else:
            out_ref[...] = sigmoid(residual).astype(out_ref.dtype)


def sigmoid_unit_forward(x0, x1, params, *, hidden_num,
                         tile_b=2048, weight_dtype=jnp.bfloat16):
    B, D_in = x0.shape
    B1, D_out = x1.shape
    assert B1 == B
    (wx, bx, gx, bex, wh, bh, gh, beh, ws, bs, gs, bes) = params
    L = hidden_num + 1
    n_w = hidden_num + 2          # fc_in_h + hidden layers + fc_out
    n_vecs = 6 + 3 * L

    wdt = jnp.dtype(weight_dtype)
    # bf16 path streams activations/output in bf16 (they feed the MXU as bf16
    # anyway); the f32 "exact" path keeps f32 streams for bit-comparability.
    act_dtype = jnp.float32 if wdt == jnp.dtype(jnp.float32) else jnp.bfloat16

    # ---- pack parameters: one weight stack + one vector stack (few DMA streams)
    wx_s = wx.astype(wdt)                                            # (D_in, D_out)
    wstack = jnp.concatenate([wh[None], ws], axis=0).astype(wdt)     # (n_w, D_out, D_out)
    vec_rows = [bx, gx, bex, bh, gh, beh]
    for l in range(L):
        vec_rows += [bs[l], gs[l], bes[l]]
    vecs = jnp.concatenate(vec_rows, axis=0).astype(jnp.float32)     # (n_vecs, D_out)

    x0_s = x0.astype(act_dtype)   # no-op on the f32 path
    x1_s = x1.astype(act_dtype)

    # ---- per-generation tiling / VMEM policy ----
    vmem_cap, num_cores = _tpu_caps()
    vmem_budget = int(vmem_cap * 0.85)       # headroom for Mosaic internal scratch

    a_bytes = jnp.dtype(act_dtype).itemsize
    w_bytes = wdt.itemsize
    use_single_buf = _single_buffer_constants_supported()
    w_bufs = 1 if use_single_buf else 2

    def vmem_est(tb):
        act = 2 * tb * (D_in + D_out) * a_bytes          # x0 + x1 blocks, double-buffered
        out = 2 * tb * D_out * a_bytes                    # output block, double-buffered
        wts = w_bufs * (D_in * D_out + n_w * D_out * D_out) * w_bytes
        vec = w_bufs * n_vecs * D_out * 4
        tmp = 6 * tb * D_out * 4                          # f32 residual/output/LN temporaries
        return act + out + wts + vec + tmp

    # Large single tile on 1-TC chips; split (roughly evenly) across TCs when
    # the chip has >=2 TensorCores and there is enough work to split.
    tb = _round_up(min(max(tile_b, 8), max(B, 8)), 8)
    if num_cores >= 2 and B > 8:
        tb = min(tb, _round_up(pl.cdiv(B, num_cores), 8))
    while vmem_est(tb) > vmem_budget and tb > 8:
        tb = max(8, _round_up(tb // 2, 8))
    grid = pl.cdiv(B, tb)     # ragged last tile: masked by Pallas boundary blocks

    vmem_limit = int(min(vmem_budget, max(32 * 2 ** 20, 2 * vmem_est(tb))))

    kernel = functools.partial(_sigmoid_unit_kernel, hidden_num)

    def const_spec(shape):
        idx = lambda i, _n=len(shape): (0,) * _n
        if use_single_buf:
            return pl.BlockSpec(shape, idx, pipeline_mode=pl.Buffered(1))
        return pl.BlockSpec(shape, idx)

    fwd = pl.pallas_call(
        kernel,
        out_shape=jax.ShapeDtypeStruct((B, D_out), act_dtype),
        grid_spec=pltpu.PrefetchScalarGridSpec(
            num_scalar_prefetch=0,
            grid=(grid,),
            in_specs=[
                pl.BlockSpec((tb, D_in), lambda i: (i, 0)),    # X0 tile (true width)
                pl.BlockSpec((tb, D_out), lambda i: (i, 0)),   # X1 tile (true width)
                const_spec((D_in, D_out)),                     # W fc_in_x
                const_spec((n_w, D_out, D_out)),               # W fc_in_h + hidden + fc_out
                const_spec((n_vecs, D_out)),                   # all bias / gamma / beta rows
            ],
            out_specs=pl.BlockSpec((tb, D_out), lambda i: (i, 0)),
        ),
        compiler_params=pltpu.CompilerParams(
            dimension_semantics=("parallel",),
            vmem_limit_bytes=vmem_limit,
        ),
    )
    return fwd(x0_s, x1_s, wx_s, wstack, vecs)


def make_params(key, input_num, output_num, hidden_num):
    L = hidden_num + 1
    ks = jax.random.split(key, 8)
    scale_in = 1.0 / np.sqrt(input_num)
    scale_out = 1.0 / np.sqrt(output_num)
    wx = jax.random.uniform(ks[0], (input_num, output_num), jnp.float32,
                            -scale_in, scale_in)
    bx = jax.random.uniform(ks[1], (1, output_num), jnp.float32,
                            -scale_in, scale_in)
    wh = jax.random.uniform(ks[2], (output_num, output_num), jnp.float32,
                            -scale_out, scale_out)
    bh = jax.random.uniform(ks[3], (1, output_num), jnp.float32,
                            -scale_out, scale_out)
    ws = jax.random.uniform(ks[4], (L, output_num, output_num), jnp.float32,
                            -scale_out, scale_out)
    bs = jax.random.uniform(ks[5], (L, 1, output_num), jnp.float32,
                            -scale_out, scale_out)
    # LayerNorm affine params: gamma=1, beta=0 (PyTorch default init)
    gx = jnp.ones((1, output_num), jnp.float32)
    bex = jnp.zeros((1, output_num), jnp.float32)
    gh = jnp.ones((1, output_num), jnp.float32)
    beh = jnp.zeros((1, output_num), jnp.float32)
    gs = jnp.ones((L, 1, output_num), jnp.float32)
    bes = jnp.zeros((L, 1, output_num), jnp.float32)
    return (wx, bx, gx, bex, wh, bh, gh, beh, ws, bs, gs, bes)


def reference_forward(x0, x1, params, hidden_num):
    (wx, bx, gx, bex, wh, bh, gh, beh, ws, bs, gs, bes) = params
    hx = _layernorm(x0 @ wx + bx, gx, bex)
    hh = _layernorm(x1 @ wh + bh, gh, beh)
    residual = hx + hh
    output = jax.nn.sigmoid(residual)
    for l in range(hidden_num):
        residual = residual + _layernorm(output @ ws[l] + bs[l], gs[l], bes[l])
        output = jax.nn.sigmoid(residual)
    return jax.nn.sigmoid(
        residual + _layernorm(output @ ws[hidden_num] + bs[hidden_num],
                              gs[hidden_num], bes[hidden_num]))


if __name__ == "__main__":
    input_num, output_num, hidden_num = 16, 32, 2
    B = 20   # deliberately NOT a multiple of 8 / the batch tile (exercises the
             # ragged boundary-block path instead of wrapper-side padding)

    key = jax.random.PRNGKey(0)
    k0, k1, kp = jax.random.split(key, 3)
    x0 = jax.random.normal(k0, (B, input_num), jnp.float32)
    x1 = jax.random.normal(k1, (B, output_num), jnp.float32)
    params = make_params(kp, input_num, output_num, hidden_num)

    ref = reference_forward(x0, x1, params, hidden_num)

    # Exact-semantics path (f32 weights + f32 streams). Tolerance is slightly
    # looser than pure ULP because the in-kernel sigmoid uses the tanh identity
    # (differs from jax.nn.sigmoid by a few ULPs before propagation).
    out_f32 = sigmoid_unit_forward(x0, x1, params, hidden_num=hidden_num,
                                   weight_dtype=jnp.float32)
    out_f32 = jax.block_until_ready(out_f32)
    np.testing.assert_allclose(np.asarray(out_f32), np.asarray(ref),
                               rtol=5e-5, atol=5e-5)

    # Optimized path: bf16 streams + bf16 MXU operands, f32 accumulation/LN.
    out_bf16 = sigmoid_unit_forward(x0, x1, params, hidden_num=hidden_num,
                                    weight_dtype=jnp.bfloat16)
    out_bf16 = jax.block_until_ready(out_bf16)
    np.testing.assert_allclose(np.asarray(out_bf16.astype(jnp.float32)),
                               np.asarray(ref), rtol=2e-2, atol=2e-2)

    print("KERNEL_OK")
</pallas_src>

<mosaic_0001>
module attributes {stable_mosaic.version = 11 : i64} {
  func.func @_probe_copy_kernel(%arg0: i32, %arg1: memref<8x128xf32, #tpu.memory_space<vmem>>, %arg2: memref<8x128xf32, #tpu.memory_space<vmem>>) attributes {dimension_semantics = [#tpu.dimension_semantics<arbitrary>], iteration_bounds = array<i64: 1>, scalar_prefetch = 0 : i64, scratch_operands = 0 : i64, tpu.core_type = #tpu.core_type<tc>, window_params = [{pipeline_mode = #tpu.pipeline_mode<synchronous>, transform_indices = @transform_0, window_bounds = array<i64: 8, 128>}, {pipeline_mode = #tpu.pipeline_mode<synchronous>, transform_indices = @transform_1, window_bounds = array<i64: 8, 128>}]} {
    %c0 = arith.constant 0 : index
    %c0_0 = arith.constant 0 : index
    %0 = vector.load %arg1[%c0, %c0_0] : memref<8x128xf32, #tpu.memory_space<vmem>>, vector<8x128xf32>
    %c0_1 = arith.constant 0 : index
    %c0_2 = arith.constant 0 : index
    %1 = vector.load %arg2[%c0_1, %c0_2] : memref<8x128xf32, #tpu.memory_space<vmem>>, vector<8x128xf32>
    tpu.vector_store %arg2[%c0_1, %c0_2], %0 {strides = array<i32>} : memref<8x128xf32, #tpu.memory_space<vmem>>, vector<8x128xf32>,
    return
  }
  func.func @transform_0(%arg0: i32) -> (i32, i32) {
    %c0_i32 = arith.constant 0 : i32
    %c0_i32_0 = arith.constant 0 : i32
    %c0_i32_1 = arith.constant 0 : i32
    return %c0_i32, %c0_i32_0 : i32, i32
  }
  func.func @transform_1(%arg0: i32) -> (i32, i32) {
    %c0_i32 = arith.constant 0 : i32
    %c0_i32_0 = arith.constant 0 : i32
    %c0_i32_1 = arith.constant 0 : i32
    return %c0_i32, %c0_i32_0 : i32, i32
  }
}

module attributes {stable_mosaic.version = 11 : i64} {
  func.func @_sigmoid_unit_kernel(%arg0: i32, %arg1: memref<24x16xf32, #tpu.memory_space<vmem>>, %arg2: memref<24x32xf32, #tpu.memory_space<vmem>>, %arg3: memref<16x32xf32, #tpu.memory_space<vmem>>, %arg4: memref<4x32x32xf32, #tpu.memory_space<vmem>>, %arg5: memref<15x32xf32, #tpu.memory_space<vmem>>, %arg6: memref<24x32xf32, #tpu.memory_space<vmem>>) attributes {dimension_semantics = [#tpu.dimension_semantics<parallel>], iteration_bounds = array<i64: 1>, scalar_prefetch = 0 : i64, scratch_operands = 0 : i64, tpu.core_type = #tpu.core_type<tc>, window_params = [{transform_indices = @transform_0, window_bounds = array<i64: 24, 16>}, {transform_indices = @transform_1, window_bounds = array<i64: 24, 32>}, {pipeline_mode = #tpu.pipeline_mode<synchronous>, transform_indices = @transform_2, window_bounds = array<i64: 16, 32>}, {pipeline_mode = #tpu.pipeline_mode<synchronous>, transform_indices = @transform_3, window_bounds = array<i64: 4, 32, 32>}, {pipeline_mode = #tpu.pipeline_mode<synchronous>, transform_indices = @transform_4, window_bounds = array<i64: 15, 32>}, {transform_indices = @transform_5, window_bounds = array<i64: 24, 32>}]} {
    %c0 = arith.constant 0 : index
    %c0_0 = arith.constant 0 : index
    %0 = vector.load %arg1[%c0, %c0_0] : memref<24x16xf32, #tpu.memory_space<vmem>>, vector<24x16xf32>
    %c0_1 = arith.constant 0 : index
    %c0_2 = arith.constant 0 : index
    %1 = vector.load %arg2[%c0_1, %c0_2] : memref<24x32xf32, #tpu.memory_space<vmem>>, vector<24x32xf32>
    %c0_3 = arith.constant 0 : index
    %c0_4 = arith.constant 0 : index
    %2 = vector.load %arg5[%c0_3, %c0_4] : memref<15x32xf32, #tpu.memory_space<vmem>>, vector<15x32xf32>
    %c0_5 = arith.constant 0 : index
    %c0_6 = arith.constant 0 : index
    %3 = vector.load %arg3[%c0_5, %c0_6] : memref<16x32xf32, #tpu.memory_space<vmem>>, vector<16x32xf32>
    %4 = vector.extract_strided_slice %2 {offsets = [0, 0], sizes = [1, 32], strides = [1, 1]} : vector<15x32xf32> to vector<1x32xf32>
    %cst = arith.constant dense<0.000000e+00> : vector<24x32xf32>
    %5 = tpu.matmul %0, %3, %cst {dimension_numbers = #tpu.dot_dimension_numbers<[1], [0], [0], [1], [0, 0, 1, 1], [], []>} : vector<24x16xf32>, vector<16x32xf32>, vector<24x32xf32> -> vector<24x32xf32>
    %6 = vector.broadcast %4 : vector<1x32xf32> to vector<24x32xf32>
    %7 = arith.addf %5, %6 : vector<24x32xf32>
    %8 = vector.extract_strided_slice %2 {offsets = [1, 0], sizes = [1, 32], strides = [1, 1]} : vector<15x32xf32> to vector<1x32xf32>
    %9 = vector.extract_strided_slice %2 {offsets = [2, 0], sizes = [1, 32], strides = [1, 1]} : vector<15x32xf32> to vector<1x32xf32>
    %cst_7 = arith.constant dense<0.000000e+00> : vector<24xf32>
    %10 = vector.multi_reduction <add>, %7, %cst_7 [1] : vector<24x32xf32> to vector<24xf32>
    %11 = vector.shape_cast %10 : vector<24xf32> to vector<24x1xf32>
    %cst_8 = arith.constant 3.200000e+01 : f32
    %12 = vector.broadcast %cst_8 : f32 to vector<24x1xf32>
    %13 = arith.divf %11, %12 : vector<24x1xf32>
    %14 = vector.broadcast %13 : vector<24x1xf32> to vector<24x32xf32>
    %15 = arith.subf %7, %14 : vector<24x32xf32>
    %16 = arith.mulf %15, %15 : vector<24x32xf32>
    %cst_9 = arith.constant dense<0.000000e+00> : vector<24xf32>
    %17 = vector.multi_reduction <add>, %16, %cst_9 [1] : vector<24x32xf32> to vector<24xf32>
    %18 = vector.shape_cast %17 : vector<24xf32> to vector<24x1xf32>
    %cst_10 = arith.constant 3.200000e+01 : f32
    %19 = vector.broadcast %cst_10 : f32 to vector<24x1xf32>
    %20 = arith.divf %18, %19 : vector<24x1xf32>
    %cst_11 = arith.constant 9.99999974E-6 : f32
    %21 = vector.broadcast %cst_11 : f32 to vector<24x1xf32>
    %22 = arith.addf %20, %21 : vector<24x1xf32>
    %23 = math.rsqrt %22 : vector<24x1xf32>
    %24 = vector.broadcast %23 : vector<24x1xf32> to vector<24x32xf32>
    %25 = arith.mulf %15, %24 : vector<24x32xf32>
    %26 = vector.broadcast %8 : vector<1x32xf32> to vector<24x32xf32>
    %27 = arith.mulf %25, %26 : vector<24x32xf32>
    %28 = vector.broadcast %9 : vector<1x32xf32> to vector<24x32xf32>
    %29 = arith.addf %27, %28 : vector<24x32xf32>
    %c0_12 = arith.constant 0 : index
    %c0_13 = arith.constant 0 : index
    %c0_14 = arith.constant 0 : index
    %30 = vector.load %arg4[%c0_12, %c0_13, %c0_14] : memref<4x32x32xf32, #tpu.memory_space<vmem>>, vector<1x32x32xf32>
    %31 = vector.shape_cast %30 : vector<1x32x32xf32> to vector<32x32xf32>
    %32 = vector.extract_strided_slice %2 {offsets = [3, 0], sizes = [1, 32], strides = [1, 1]} : vector<15x32xf32> to vector<1x32xf32>
    %cst_15 = arith.constant dense<0.000000e+00> : vector<24x32xf32>
    %33 = tpu.matmul %1, %31, %cst_15 {dimension_numbers = #tpu.dot_dimension_numbers<[1], [0], [0], [1], [0, 0, 1, 1], [], []>} : vector<24x32xf32>, vector<32x32xf32>, vector<24x32xf32> -> vector<24x32xf32>
    %34 = vector.broadcast %32 : vector<1x32xf32> to vector<24x32xf32>
    %35 = arith.addf %33, %34 : vector<24x32xf32>
    %36 = vector.extract_strided_slice %2 {offsets = [4, 0], sizes = [1, 32], strides = [1, 1]} : vector<15x32xf32> to vector<1x32xf32>
    %37 = vector.extract_strided_slice %2 {offsets = [5, 0], sizes = [1, 32], strides = [1, 1]} : vector<15x32xf32> to vector<1x32xf32>
    %cst_16 = arith.constant dense<0.000000e+00> : vector<24xf32>
    %38 = vector.multi_reduction <add>, %35, %cst_16 [1] : vector<24x32xf32> to vector<24xf32>
    %39 = vector.shape_cast %38 : vector<24xf32> to vector<24x1xf32>
    %cst_17 = arith.constant 3.200000e+01 : f32
    %40 = vector.broadcast %cst_17 : f32 to vector<24x1xf32>
    %41 = arith.divf %39, %40 : vector<24x1xf32>
    %42 = vector.broadcast %41 : vector<24x1xf32> to vector<24x32xf32>
    %43 = arith.subf %35, %42 : vector<24x32xf32>
    %44 = arith.mulf %43, %43 : vector<24x32xf32>
    %cst_18 = arith.constant dense<0.000000e+00> : vector<24xf32>
    %45 = vector.multi_reduction <add>, %44, %cst_18 [1] : vector<24x32xf32> to vector<24xf32>
    %46 = vector.shape_cast %45 : vector<24xf32> to vector<24x1xf32>
    %cst_19 = arith.constant 3.200000e+01 : f32
    %47 = vector.broadcast %cst_19 : f32 to vector<24x1xf32>
    %48 = arith.divf %46, %47 : vector<24x1xf32>
    %cst_20 = arith.constant 9.99999974E-6 : f32
    %49 = vector.broadcast %cst_20 : f32 to vector<24x1xf32>
    %50 = arith.addf %48, %49 : vector<24x1xf32>
    %51 = math.rsqrt %50 : vector<24x1xf32>
    %52 = vector.broadcast %51 : vector<24x1xf32> to vector<24x32xf32>
    %53 = arith.mulf %43, %52 : vector<24x32xf32>
    %54 = vector.broadcast %36 : vector<1x32xf32> to vector<24x32xf32>
    %55 = arith.mulf %53, %54 : vector<24x32xf32>
    %56 = vector.broadcast %37 : vector<1x32xf32> to vector<24x32xf32>
    %57 = arith.addf %55, %56 : vector<24x32xf32>
    %58 = arith.addf %29, %57 : vector<24x32xf32>
    %cst_21 = arith.constant 5.000000e-01 : f32
    %59 = vector.broadcast %cst_21 : f32 to vector<24x32xf32>
    %60 = arith.mulf %59, %58 : vector<24x32xf32>
    %61 = math.tanh %60 : vector<24x32xf32>
    %cst_22 = arith.constant 5.000000e-01 : f32
    %62 = vector.broadcast %cst_22 : f32 to vector<24x32xf32>
    %63 = arith.mulf %62, %61 : vector<24x32xf32>
    %cst_23 = arith.constant 5.000000e-01 : f32
    %64 = vector.broadcast %cst_23 : f32 to vector<24x32xf32>
    %65 = arith.addf %63, %64 : vector<24x32xf32>
    %c1 = arith.constant 1 : index
    %c0_24 = arith.constant 0 : index
    %c0_25 = arith.constant 0 : index
    %66 = vector.load %arg4[%c1, %c0_24, %c0_25] : memref<4x32x32xf32, #tpu.memory_space<vmem>>, vector<1x32x32xf32>
    %67 = vector.shape_cast %66 : vector<1x32x32xf32> to vector<32x32xf32>
    %68 = vector.extract_strided_slice %2 {offsets = [6, 0], sizes = [1, 32], strides = [1, 1]} : vector<15x32xf32> to vector<1x32xf32>
    %cst_26 = arith.constant dense<0.000000e+00> : vector<24x32xf32>
    %69 = tpu.matmul %65, %67, %cst_26 {dimension_numbers = #tpu.dot_dimension_numbers<[1], [0], [0], [1], [0, 0, 1, 1], [], []>} : vector<24x32xf32>, vector<32x32xf32>, vector<24x32xf32> -> vector<24x32xf32>
    %70 = vector.broadcast %68 : vector<1x32xf32> to vector<24x32xf32>
    %71 = arith.addf %69, %70 : vector<24x32xf32>
    %72 = vector.extract_strided_slice %2 {offsets = [7, 0], sizes = [1, 32], strides = [1, 1]} : vector<15x32xf32> to vector<1x32xf32>
    %73 = vector.extract_strided_slice %2 {offsets = [8, 0], sizes = [1, 32], strides = [1, 1]} : vector<15x32xf32> to vector<1x32xf32>
    %cst_27 = arith.constant dense<0.000000e+00> : vector<24xf32>
    %74 = vector.multi_reduction <add>, %71, %cst_27 [1] : vector<24x32xf32> to vector<24xf32>
    %75 = vector.shape_cast %74 : vector<24xf32> to vector<24x1xf32>
    %cst_28 = arith.constant 3.200000e+01 : f32
    %76 = vector.broadcast %cst_28 : f32 to vector<24x1xf32>
    %77 = arith.divf %75, %76 : vector<24x1xf32>
    %78 = vector.broadcast %77 : vector<24x1xf32> to vector<24x32xf32>
    %79 = arith.subf %71, %78 : vector<24x32xf32>
    %80 = arith.mulf %79, %79 : vector<24x32xf32>
    %cst_29 = arith.constant dense<0.000000e+00> : vector<24xf32>
    %81 = vector.multi_reduction <add>, %80, %cst_29 [1] : vector<24x32xf32> to vector<24xf32>
    %82 = vector.shape_cast %81 : vector<24xf32> to vector<24x1xf32>
    %cst_30 = arith.constant 3.200000e+01 : f32
    %83 = vector.broadcast %cst_30 : f32 to vector<24x1xf32>
    %84 = arith.divf %82, %83 : vector<24x1xf32>
    %cst_31 = arith.constant 9.99999974E-6 : f32
    %85 = vector.broadcast %cst_31 : f32 to vector<24x1xf32>
    %86 = arith.addf %84, %85 : vector<24x1xf32>
    %87 = math.rsqrt %86 : vector<24x1xf32>
    %88 = vector.broadcast %87 : vector<24x1xf32> to vector<24x32xf32>
    %89 = arith.mulf %79, %88 : vector<24x32xf32>
    %90 = vector.broadcast %72 : vector<1x32xf32> to vector<24x32xf32>
    %91 = arith.mulf %89, %90 : vector<24x32xf32>
    %92 = vector.broadcast %73 : vector<1x32xf32> to vector<24x32xf32>
    %93 = arith.addf %91, %92 : vector<24x32xf32>
    %94 = arith.addf %58, %93 : vector<24x32xf32>
    %cst_32 = arith.constant 5.000000e-01 : f32
    %95 = vector.broadcast %cst_32 : f32 to vector<24x32xf32>
    %96 = arith.mulf %95, %94 : vector<24x32xf32>
    %97 = math.tanh %96 : vector<24x32xf32>
    %cst_33 = arith.constant 5.000000e-01 : f32
    %98 = vector.broadcast %cst_33 : f32 to vector<24x32xf32>
    %99 = arith.mulf %98, %97 : vector<24x32xf32>
    %cst_34 = arith.constant 5.000000e-01 : f32
    %100 = vector.broadcast %cst_34 : f32 to vector<24x32xf32>
    %101 = arith.addf %99, %100 : vector<24x32xf32>
    %c2 = arith.constant 2 : index
    %c0_35 = arith.constant 0 : index
    %c0_36 = arith.constant 0 : index
    %102 = vector.load %arg4[%c2, %c0_35, %c0_36] : memref<4x32x32xf32, #tpu.memory_space<vmem>>, vector<1x32x32xf32>
    %103 = vector.shape_cast %102 : vector<1x32x32xf32> to vector<32x32xf32>
    %104 = vector.extract_strided_slice %2 {offsets = [9, 0], sizes = [1, 32], strides = [1, 1]} : vector<15x32xf32> to vector<1x32xf32>
    %cst_37 = arith.constant dense<0.000000e+00> : vector<24x32xf32>
    %105 = tpu.matmul %101, %103, %cst_37 {dimension_numbers = #tpu.dot_dimension_numbers<[1], [0], [0], [1], [0, 0, 1, 1], [], []>} : vector<24x32xf32>, vector<32x32xf32>, vector<24x32xf32> -> vector<24x32xf32>
    %106 = vector.broadcast %104 : vector<1x32xf32> to vector<24x32xf32>
    %107 = arith.addf %105, %106 : vector<24x32xf32>
    %108 = vector.extract_strided_slice %2 {offsets = [10, 0], sizes = [1, 32], strides = [1, 1]} : vector<15x32xf32> to vector<1x32xf32>
    %109 = vector.extract_strided_slice %2 {offsets = [11, 0], sizes = [1, 32], strides = [1, 1]} : vector<15x32xf32> to vector<1x32xf32>
    %cst_38 = arith.constant dense<0.000000e+00> : vector<24xf32>
    %110 = vector.multi_reduction <add>, %107, %cst_38 [1] : vector<24x32xf32> to vector<24xf32>
    %111 = vector.shape_cast %110 : vector<24xf32> to vector<24x1xf32>
    %cst_39 = arith.constant 3.200000e+01 : f32
    %112 = vector.broadcast %cst_39 : f32 to vector<24x1xf32>
    %113 = arith.divf %111, %112 : vector<24x1xf32>
    %114 = vector.broadcast %113 : vector<24x1xf32> to vector<24x32xf32>
    %115 = arith.subf %107, %114 : vector<24x32xf32>
    %116 = arith.mulf %115, %115 : vector<24x32xf32>
    %cst_40 = arith.constant dense<0.000000e+00> : vector<24xf32>
    %117 = vector.multi_reduction <add>, %116, %cst_40 [1] : vector<24x32xf32> to vector<24xf32>
    %118 = vector.shape_cast %117 : vector<24xf32> to vector<24x1xf32>
    %cst_41 = arith.constant 3.200000e+01 : f32
    %119 = vector.broadcast %cst_41 : f32 to vector<24x1xf32>
    %120 = arith.divf %118, %119 : vector<24x1xf32>
    %cst_42 = arith.constant 9.99999974E-6 : f32
    %121 = vector.broadcast %cst_42 : f32 to vector<24x1xf32>
    %122 = arith.addf %120, %121 : vector<24x1xf32>
    %123 = math.rsqrt %122 : vector<24x1xf32>
    %124 = vector.broadcast %123 : vector<24x1xf32> to vector<24x32xf32>
    %125 = arith.mulf %115, %124 : vector<24x32xf32>
    %126 = vector.broadcast %108 : vector<1x32xf32> to vector<24x32xf32>
    %127 = arith.mulf %125, %126 : vector<24x32xf32>
    %128 = vector.broadcast %109 : vector<1x32xf32> to vector<24x32xf32>
    %129 = arith.addf %127, %128 : vector<24x32xf32>
    %130 = arith.addf %94, %129 : vector<24x32xf32>
    %cst_43 = arith.constant 5.000000e-01 : f32
    %131 = vector.broadcast %cst_43 : f32 to vector<24x32xf32>
    %132 = arith.mulf %131, %130 : vector<24x32xf32>
    %133 = math.tanh %132 : vector<24x32xf32>
    %cst_44 = arith.constant 5.000000e-01 : f32
    %134 = vector.broadcast %cst_44 : f32 to vector<24x32xf32>
    %135 = arith.mulf %134, %133 : vector<24x32xf32>
    %cst_45 = arith.constant 5.000000e-01 : f32
    %136 = vector.broadcast %cst_45 : f32 to vector<24x32xf32>
    %137 = arith.addf %135, %136 : vector<24x32xf32>
    %c3 = arith.constant 3 : index
    %c0_46 = arith.constant 0 : index
    %c0_47 = arith.constant 0 : index
    %138 = vector.load %arg4[%c3, %c0_46, %c0_47] : memref<4x32x32xf32, #tpu.memory_space<vmem>>, vector<1x32x32xf32>
    %139 = vector.shape_cast %138 : vector<1x32x32xf32> to vector<32x32xf32>
    %140 = vector.extract_strided_slice %2 {offsets = [12, 0], sizes = [1, 32], strides = [1, 1]} : vector<15x32xf32> to vector<1x32xf32>
    %cst_48 = arith.constant dense<0.000000e+00> : vector<24x32xf32>
    %141 = tpu.matmul %137, %139, %cst_48 {dimension_numbers = #tpu.dot_dimension_numbers<[1], [0], [0], [1], [0, 0, 1, 1], [], []>} : vector<24x32xf32>, vector<32x32xf32>, vector<24x32xf32> -> vector<24x32xf32>
    %142 = vector.broadcast %140 : vector<1x32xf32> to vector<24x32xf32>
    %143 = arith.addf %141, %142 : vector<24x32xf32>
    %144 = vector.extract_strided_slice %2 {offsets = [13, 0], sizes = [1, 32], strides = [1, 1]} : vector<15x32xf32> to vector<1x32xf32>
    %145 = vector.extract_strided_slice %2 {offsets = [14, 0], sizes = [1, 32], strides = [1, 1]} : vector<15x32xf32> to vector<1x32xf32>
    %cst_49 = arith.constant dense<0.000000e+00> : vector<24xf32>
    %146 = vector.multi_reduction <add>, %143, %cst_49 [1] : vector<24x32xf32> to vector<24xf32>
    %147 = vector.shape_cast %146 : vector<24xf32> to vector<24x1xf32>
    %cst_50 = arith.constant 3.200000e+01 : f32
    %148 = vector.broadcast %cst_50 : f32 to vector<24x1xf32>
    %149 = arith.divf %147, %148 : vector<24x1xf32>
    %150 = vector.broadcast %149 : vector<24x1xf32> to vector<24x32xf32>
    %151 = arith.subf %143, %150 : vector<24x32xf32>
    %152 = arith.mulf %151, %151 : vector<24x32xf32>
    %cst_51 = arith.constant dense<0.000000e+00> : vector<24xf32>
    %153 = vector.multi_reduction <add>, %152, %cst_51 [1] : vector<24x32xf32> to vector<24xf32>
    %154 = vector.shape_cast %153 : vector<24xf32> to vector<24x1xf32>
    %cst_52 = arith.constant 3.200000e+01 : f32
    %155 = vector.broadcast %cst_52 : f32 to vector<24x1xf32>
    %156 = arith.divf %154, %155 : vector<24x1xf32>
    %cst_53 = arith.constant 9.99999974E-6 : f32
    %157 = vector.broadcast %cst_53 : f32 to vector<24x1xf32>
    %158 = arith.addf %156, %157 : vector<24x1xf32>
    %159 = math.rsqrt %158 : vector<24x1xf32>
    %160 = vector.broadcast %159 : vector<24x1xf32> to vector<24x32xf32>
    %161 = arith.mulf %151, %160 : vector<24x32xf32>
    %162 = vector.broadcast %144 : vector<1x32xf32> to vector<24x32xf32>
    %163 = arith.mulf %161, %162 : vector<24x32xf32>
    %164 = vector.broadcast %145 : vector<1x32xf32> to vector<24x32xf32>
    %165 = arith.addf %163, %164 : vector<24x32xf32>
    %166 = arith.addf %130, %165 : vector<24x32xf32>
    %cst_54 = arith.constant 5.000000e-01 : f32
    %167 = vector.broadcast %cst_54 : f32 to vector<24x32xf32>
    %168 = arith.mulf %167, %166 : vector<24x32xf32>
    %169 = math.tanh %168 : vector<24x32xf32>
    %cst_55 = arith.constant 5.000000e-01 : f32
    %170 = vector.broadcast %cst_55 : f32 to vector<24x32xf32>
    %171 = arith.mulf %170, %169 : vector<24x32xf32>
    %cst_56 = arith.constant 5.000000e-01 : f32
    %172 = vector.broadcast %cst_56 : f32 to vector<24x32xf32>
    %173 = arith.addf %171, %172 : vector<24x32xf32>
    %c0_57 = arith.constant 0 : index
    %c0_58 = arith.constant 0 : index
    %174 = vector.load %arg6[%c0_57, %c0_58] : memref<24x32xf32, #tpu.memory_space<vmem>>, vector<24x32xf32>
    tpu.vector_store %arg6[%c0_57, %c0_58], %173 {strides = array<i32>} : memref<24x32xf32, #tpu.memory_space<vmem>>, vector<24x32xf32>,
    return
  }
  func.func @transform_0(%arg0: i32) -> (i32, i32) {
    %c0_i32 = arith.constant 0 : i32
    %c0_i32_0 = arith.constant 0 : i32
    return %arg0, %c0_i32 : i32, i32
  }
  func.func @transform_1(%arg0: i32) -> (i32, i32) {
    %c0_i32 = arith.constant 0 : i32
    %c0_i32_0 = arith.constant 0 : i32
    return %arg0, %c0_i32 : i32, i32
  }
  func.func @transform_2(%arg0: i32) -> (i32, i32) {
    %c0_i32 = arith.constant 0 : i32
    %c0_i32_0 = arith.constant 0 : i32
    %c0_i32_1 = arith.constant 0 : i32
    return %c0_i32, %c0_i32_0 : i32, i32
  }
  func.func @transform_3(%arg0: i32) -> (i32, i32, i32) {
    %c0_i32 = arith.constant 0 : i32
    %c0_i32_0 = arith.constant 0 : i32
    %c0_i32_1 = arith.constant 0 : i32
    %c0_i32_2 = arith.constant 0 : i32
    return %c0_i32, %c0_i32_0, %c0_i32_1 : i32, i32, i32
  }
  func.func @transform_4(%arg0: i32) -> (i32, i32) {
    %c0_i32 = arith.constant 0 : i32
    %c0_i32_0 = arith.constant 0 : i32
    %c0_i32_1 = arith.constant 0 : i32
    return %c0_i32, %c0_i32_0 : i32, i32
  }
  func.func @transform_5(%arg0: i32) -> (i32, i32) {
    %c0_i32 = arith.constant 0 : i32
    %c0_i32_0 = arith.constant 0 : i32
    return %arg0, %c0_i32 : i32, i32
  }
}

</mosaic_0001>

<llo_original>
// kernel: tpu_custom_call.1
$region0: #{tpu_custom_call.1}
  #allocation0 [shape = 'u32[]', space=smem, size = 0x4, offset = 0x4, fixed_abs, tag = 'smem constant byte address 0x4 - core index']
  #allocation1 [shape = 'u32[144,128]{1,0:T(1,128)}', space=vmem, size = 0x12000, scoped, tag = 'internal scratch']
  %s0 = inlined_call_operand.hbm [shape: f32[8,128], index: 0, kind: input, shape index: {}]
  %s1 = inlined_call_operand.hbm [shape: f32[8,128], index: 1, kind: output, shape index: {}]
  %s2 = sld [smem:[#allocation0]]
  $region18: #{tpu_custom_call.1} parent=0
    _
  %s4 = ssub.s32 1, %s2
  %s5 = scalar_select 0, %s4, %s2
  $region1: #{tpu_custom_call.1} parent=0
    #allocation2 [shape = 'u8[4096]{0}', space=vmem, size = 0x1000, scoped, tag = 'input window, operand 0, single buffered']
    #allocation3 [shape = 's32[1]{0}', space=sflag, size = 0x4, scoped, tag = 'scoped memory for tpu_custom_call.1']
    #allocation4 [shape = 's32[1]{0}', space=sflag, size = 0x4, scoped, tag = 'scoped memory for tpu_custom_call.1']
    #allocation5 [shape = 'u8[4096]{0}', space=vmem, size = 0x1000, scoped, tag = 'output window, operand 0, single buffered']
    %6 = vsyncpa [#allocation3], 0
    %7 = vsyncpa [#allocation4], 0
    // Predicated region
    $region2: #{tpu_custom_call.1} parent=1 // pred_check
      _
    $region3: #{tpu_custom_call.1} parent=1 // pred_check_branch
      %9 = sbr.rel (0) target = $region5
    $region4: #{tpu_custom_call.1} parent=1 // pred_region
      %s11 = ssub.s32 128, 128
      %12 = vsyncadd [#allocation3], %s11
      %s14 = sshll.u32 [#allocation2], 4
      %s15 = int_to_ptr.vmem [resolvable:$true] %s14
      %17 = dma.hbm_to_vmem [thread:$0]  %s0, 128, %s15, [#allocation3]
    $region5: #{tpu_custom_call.1} parent=1 // pred_fallthru
      _
    // Predicated region
    $region6: #{tpu_custom_call.1} parent=1 // pred_check
      _
    $region7: #{tpu_custom_call.1} parent=1 // pred_check_branch
      %19 = sbr.rel (0) target = $region9
    $region8: #{tpu_custom_call.1} parent=1 // pred_region
      %20 = dma.done [#allocation3], 128
    $region9: #{tpu_custom_call.1} parent=1 // pred_fallthru
      _
    %v21 = vld [vmem:[#allocation2] sm:$0xff]
    %22 = vst [vmem:[#allocation5] sm:$0xff] %v21
    // Predicated region
    $region10: #{tpu_custom_call.1} parent=1 // pred_check
      _
    $region11: #{tpu_custom_call.1} parent=1 // pred_check_branch
      %24 = sbr.rel (0) target = $region13
    $region12: #{tpu_custom_call.1} parent=1 // pred_region
      %s26 = ssub.s32 128, 128
      %27 = vsyncadd [#allocation4], %s26
      %s29 = sshll.u32 [#allocation5], 4
      %s30 = int_to_ptr.vmem [resolvable:$true] %s29
      %32 = dma.vmem_to_hbm [thread:$0]  %s30, 128, %s1, [#allocation4]
    $region13: #{tpu_custom_call.1} parent=1 // pred_fallthru
      _
    // Predicated region
    $region14: #{tpu_custom_call.1} parent=1 // pred_check
      _
    $region15: #{tpu_custom_call.1} parent=1 // pred_check_branch
      %34 = sbr.rel (0) target = $region17
    $region16: #{tpu_custom_call.1} parent=1 // pred_region
      %35 = dma.done [#allocation4], 128
    $region17: #{tpu_custom_call.1} parent=1 // pred_fallthru
      _
    %36 = vsyncpa [#allocation3], 1
    %37 = vsyncpa [#allocation4], 1

// kernel: tpu_custom_call.1
$region0: #{tpu_custom_call.1}
  #allocation0 [shape = 'u32[]', space=smem, size = 0x4, offset = 0x4, fixed_abs, tag = 'smem constant byte address 0x4 - core index']
  #allocation1 [shape = 'u32[144,128]{1,0:T(1,128)}', space=vmem, size = 0x12000, scoped, tag = 'internal scratch']
  %s0 = inlined_call_operand.vmem [shape: f32[20,16], index: 0, kind: input, shape index: {}]
  %s1 = inlined_call_operand.vmem [shape: f32[20,32], index: 1, kind: input, shape index: {}]
  %s2 = inlined_call_operand.vmem [shape: f32[16,32], index: 2, kind: input, shape index: {}]
  %s3 = inlined_call_operand.hbm [shape: f32[4,32,32], index: 3, kind: input, shape index: {}]
  %s4 = inlined_call_operand.hbm [shape: f32[15,32], index: 4, kind: input, shape index: {}]
  %s5 = inlined_call_operand.hbm [shape: f32[20,32], index: 5, kind: output, shape index: {}]
  %s6 = sld [smem:[#allocation0]]
  $region38: #{tpu_custom_call.1} parent=0
    _
  %s8 = ssub.s32 1, %s6
  %s9 = scalar_select 0, %s8, %s6
  $region1: #{tpu_custom_call.1} parent=0
    #allocation2 [shape = 'u8[65536]{0}', space=vmem, size = 0x10000, scoped, tag = 'input window, operand 3, single buffered']
    #allocation3 [shape = 's32[1]{0}', space=sflag, size = 0x4, scoped, tag = 'scoped memory for tpu_custom_call.1']
    #allocation4 [shape = 's32[1]{0}', space=sflag, size = 0x4, scoped, tag = 'scoped memory for tpu_custom_call.1']
    #allocation5 [shape = 'u8[8192]{0}', space=vmem, size = 0x2000, scoped, tag = 'input window, operand 4, single buffered']
    #allocation6 [shape = 's32[1]{0}', space=sflag, size = 0x4, scoped, tag = 'scoped memory for tpu_custom_call.1']
    #allocation7 [shape = 'u8[12288]{0}', space=vmem, size = 0x3000, scoped, tag = 'output window, operand 0, single buffered']
    %10 = vsyncpa [#allocation3], 0
    %11 = vsyncpa [#allocation6], 0
    %12 = vsyncpa [#allocation4], 0
    // Predicated region
    $region2: #{tpu_custom_call.1} parent=1 // pred_check
      _
    $region3: #{tpu_custom_call.1} parent=1 // pred_check_branch
      %14 = sbr.rel (0) target = $region5
    $region4: #{tpu_custom_call.1} parent=1 // pred_region
      _
    $region5: #{tpu_custom_call.1} parent=1 // pred_fallthru
      _
    // Predicated region
    $region6: #{tpu_custom_call.1} parent=1 // pred_check
      _
    $region7: #{tpu_custom_call.1} parent=1 // pred_check_branch
      %16 = sbr.rel (0) target = $region9
    $region8: #{tpu_custom_call.1} parent=1 // pred_region
      _
    $region9: #{tpu_custom_call.1} parent=1 // pred_fallthru
      _
    // Predicated region
    $region10: #{tpu_custom_call.1} parent=1 // pred_check
      _
    $region11: #{tpu_custom_call.1} parent=1 // pred_check_branch
      %18 = sbr.rel (0) target = $region13
    $region12: #{tpu_custom_call.1} parent=1 // pred_region
      _
    $region13: #{tpu_custom_call.1} parent=1 // pred_fallthru
      _
    // Predicated region
    $region14: #{tpu_custom_call.1} parent=1 // pred_check
      _
    $region15: #{tpu_custom_call.1} parent=1 // pred_check_branch
      %20 = sbr.rel (0) target = $region17
    $region16: #{tpu_custom_call.1} parent=1 // pred_region
      %s22 = ssub.s32 2048, 2048
      %23 = vsyncadd [#allocation3], %s22
      %s24 = sshll.u32 [#allocation2], 4
      %s25 = int_to_ptr.vmem [resolvable:$true] %s24
      %30 = dma.hbm_to_vmem [thread:$0]  %s3, 2048, %s25, [#allocation3], 128, 128, 8
    $region17: #{tpu_custom_call.1} parent=1 // pred_fallthru
      _
    // Predicated region
    $region18: #{tpu_custom_call.1} parent=1 // pred_check
      _
    $region19: #{tpu_custom_call.1} parent=1 // pred_check_branch
      %32 = sbr.rel (0) target = $region21
    $region20: #{tpu_custom_call.1} parent=1 // pred_region
      %s34 = ssub.s32 256, 256
      %35 = vsyncadd [#allocation6], %s34
      %s36 = sshll.u32 [#allocation5], 4
      %s37 = int_to_ptr.vmem [resolvable:$true] %s36
      %42 = dma.hbm_to_vmem [thread:$0]  %s4, 256, %s37, [#allocation6], 128, 128, 8
    $region21: #{tpu_custom_call.1} parent=1 // pred_fallthru
      _
    // Predicated region
    $region22: #{tpu_custom_call.1} parent=1 // pred_check
      _
    $region23: #{tpu_custom_call.1} parent=1 // pred_check_branch
      %44 = sbr.rel (0) target = $region25
    $region24: #{tpu_custom_call.1} parent=1 // pred_region
      %45 = dma.done [#allocation3], 2048
    $region25: #{tpu_custom_call.1} parent=1 // pred_fallthru
      _
    // Predicated region
    $region26: #{tpu_custom_call.1} parent=1 // pred_check
      _
    $region27: #{tpu_custom_call.1} parent=1 // pred_check_branch
      %47 = sbr.rel (0) target = $region29
    $region28: #{tpu_custom_call.1} parent=1 // pred_region
      %48 = dma.done [#allocation6], 256
    $region29: #{tpu_custom_call.1} parent=1 // pred_fallthru
      _
    %v49 = vld [vmem:[%s0] sm:$0xff]
    %v50 = vld [vmem:[%s0 + $0x8] sm:$0xff]
    %v51 = vld [vmem:[%s0 + $0x10] sm:$0xff]
    %v52 = vld [vmem:[%s1] sm:$0xff]
    %v53 = vld [vmem:[%s1 + $0x8] sm:$0xff]
    %v54 = vld [vmem:[%s1 + $0x10] sm:$0xff]
    %v55 = vld [vmem:[#allocation5] sm:$0xff]
    %v56 = vld [vmem:[#allocation5 + $0x8] sm:$0x7f]
    %v57 = vld [vmem:[%s2] sm:$0xff]
    %v58 = vld [vmem:[%s2 + $0x8] sm:$0xff]
    %v59 = vlaneseq
    %v60 = vshrl.u32 %v59, 7
    %v61 = vsub.s32 0, %v60
    %v62 = vrot.slane %v55, %v61
    %vm63 = vcmask 130048
    %v65 = vsel %vm63, %v49, 0
    %v68 = vsel %vm63, %v50, 0
    %v71 = vsel %vm63, %v51, 0
    %73 = vmatprep.subr.mxu0 0.0
    %74 = vmatpush1.msra.mxu0 0.0
    %75 = vmatprep.subr.mxu0 0.0
    %76 = vmatpush1.msra.mxu0 0.0
    %77 = vmatprep.subr.mxu0 0.0
    %78 = vmatpush1.msra.mxu0 0.0
    %79 = vmatprep.subr.mxu0 0.0
    %80 = vmatpush1.msra.mxu0 0.0
    %81 = vmatprep.subr.mxu0 0.0
    %82 = vmatpush1.msra.mxu0 0.0
    %83 = vmatprep.subr.mxu0 0.0
    %84 = vmatpush1.msra.mxu0 0.0
    %85 = vmatprep.subr.mxu0 0.0
    %86 = vmatpush1.msra.mxu0 0.0
    %87 = vmatprep.subr.mxu0 0.0
    %88 = vmatpush1.msra.mxu0 0.0
    %89 = vmatprep.subr.mxu0 0.0
    %90 = vmatpush1.msra.mxu0 0.0
    %91 = vmatprep.subr.mxu0 0.0
    %92 = vmatpush1.msra.mxu0 0.0
    %93 = vmatprep.subr.mxu0 0.0
    %94 = vmatpush1.msra.mxu0 0.0
    %95 = vmatprep.subr.mxu0 0.0
    %96 = vmatpush1.msra.mxu0 0.0
    %97 = vmatprep.subr.mxu0 0.0
    %98 = vmatpush1.msra.mxu0 0.0
    %99 = vmatprep.subr.mxu0 0.0
    %100 = vmatpush1.msra.mxu0 0.0
    %101 = vmatprep.subr.mxu0 0.0
    %102 = vmatpush1.msra.mxu0 %v58
    %103 = vmatprep.subr.mxu0 0.0
    %104 = vmatpush1.msra.mxu0 %v57
    %105 = vmatprep.subr.mxu0 0.0
    %106 = vmatpush2.msra.mxu0 0.0
    %107 = vmatprep.subr.mxu0 0.0
    %108 = vmatpush2.msra.mxu0 0.0
    %109 = vmatprep.subr.mxu0 0.0
    %110 = vmatpush2.msra.mxu0 0.0
    %111 = vmatprep.subr.mxu0 0.0
    %112 = vmatpush2.msra.mxu0 0.0
    %113 = vmatprep.subr.mxu0 0.0
    %114 = vmatpush2.msra.mxu0 0.0
    %115 = vmatprep.subr.mxu0 0.0
    %116 = vmatpush2.msra.mxu0 0.0
    %117 = vmatprep.subr.mxu0 0.0
    %118 = vmatpush2.msra.mxu0 0.0
    %119 = vmatprep.subr.mxu0 0.0
    %120 = vmatpush2.msra.mxu0 0.0
    %121 = vmatprep.subr.mxu0 0.0
    %122 = vmatpush2.msra.mxu0 0.0
    %123 = vmatprep.subr.mxu0 0.0
    %124 = vmatpush2.msra.mxu0 0.0
    %125 = vmatprep.subr.mxu0 0.0
    %126 = vmatpush2.msra.mxu0 0.0
    %127 = vmatprep.subr.mxu0 0.0
    %128 = vmatpush2.msra.mxu0 0.0
    %129 = vmatprep.subr.mxu0 0.0
    %130 = vmatpush2.msra.mxu0 0.0
    %131 = vmatprep.subr.mxu0 0.0
    %132 = vmatpush2.msra.mxu0 0.0
    %133 = vmatprep.subr.mxu0 0.0
    %134 = vmatpush2.msra.mxu0 0.0
    %135 = vmatprep.subr.mxu0 0.0
    %136 = vmatpush2.msra.mxu0 0.0
    %137 = vmatprep.mubr.f32.mxu0 0.0
    %138 = vmatmul.mubr.f32.gmra.mxu0 %v65
    %v139 = vpop.f32.mrf.mxu0
    %v140 = vadd.f32 %v62, %v139
    %v141 = vpop.f32.mrf.mxu0
    %142 = vmatprep.mubr.f32.mxu0 0.0
    %143 = vmatmul.mubr.f32.gmra.mxu0 %v68
    %v144 = vpop.f32.mrf.mxu0
    %v145 = vadd.f32 %v62, %v144
    %v146 = vpop.f32.mrf.mxu0
    %147 = vmatprep.mubr.f32.mxu0 0.0
    %148 = vmatmul.mubr.f32.gmra.mxu0 %v71
    %v149 = vpop.f32.mrf.mxu0
    %v150 = vadd.f32 %v62, %v149
    %v151 = vpop.f32.mrf.mxu0
    %152 = vdwg.mxu0
    %vm153 = vcmask 261120
    %v154 = vsel %vm153, %v140, 0.0
    %155 = vadd.xlane.f32.xlu0 %v154
    %v156 = vpop.xlane.xlu0 %155
    %v157 = vsel %vm153, %v145, 0.0
    %158 = vadd.xlane.f32.xlu0 %v157
    %v159 = vpop.xlane.xlu0 %158
    %v160 = vsel %vm153, %v150, 0.0
    %161 = vadd.xlane.f32.xlu0 %v160
    %v162 = vpop.xlane.xlu0 %161
    %v163 = vrcp.pop 32.0
    %v164 = vmul.f32 %v156, %v163
    %v165 = vmul.f32 %v159, %v163
    %v166 = vmul.f32 %v162, %v163
    %v167 = vsub.f32 %v140, %v164
    %v168 = vsub.f32 %v145, %v165
    %v169 = vsub.f32 %v150, %v166
    %v170 = vmul.f32 %v167, %v167
    %v171 = vmul.f32 %v168, %v168
    %v172 = vmul.f32 %v169, %v169
    %v173 = vsel %vm153, %v170, 0.0
    %174 = vadd.xlane.f32.xlu0 %v173
    %v175 = vpop.xlane.xlu0 %174
    %v176 = vsel %vm153, %v171, 0.0
    %177 = vadd.xlane.f32.xlu0 %v176
    %v178 = vpop.xlane.xlu0 %177
    %v179 = vsel %vm153, %v172, 0.0
    %180 = vadd.xlane.f32.xlu0 %v179
    %v181 = vpop.xlane.xlu0 %180
    %v182 = vmul.f32 %v175, %v163
    %v183 = vmul.f32 %v178, %v163
    %v184 = vmul.f32 %v181, %v163
    %v185 = vadd.f32 %v182, 1e-05
    %v186 = vadd.f32 %v183, 1e-05
    %v187 = vadd.f32 %v184, 1e-05
    %v188 = vrsqrt.pop %v185
    %v189 = vrsqrt.pop %v186
    %v190 = vrsqrt.pop %v187
    %v191 = vmul.f32 %v167, %v188
    %v192 = vmul.f32 %v168, %v189
    %v193 = vmul.f32 %v169, %v190
    %v194 = vlaneseq
    %v195 = vshrl.u32 %v194, 7
    %v196 = vsub.s32 1, %v195
    %v197 = vrot.slane %v55, %v196
    %v198 = vmul.f32 %v191, %v197
    %v199 = vmul.f32 %v192, %v197
    %v200 = vmul.f32 %v193, %v197
    %v201 = vlaneseq
    %v202 = vshrl.u32 %v201, 7
    %v203 = vsub.s32 2, %v202
    %v204 = vrot.slane %v55, %v203
    %v205 = vadd.f32 %v198, %v204
    %v206 = vadd.f32 %v199, %v204
    %v207 = vadd.f32 %v200, %v204
    %v208 = vld [vmem:[#allocation2] sm:$0xff]
    %v209 = vld [vmem:[#allocation2 + $0x8] sm:$0xff]
    %v210 = vld [vmem:[#allocation2 + $0x10] sm:$0xff]
    %v211 = vld [vmem:[#allocation2 + $0x18] sm:$0xff]
    %v212 = vlaneseq
    %v213 = vshrl.u32 %v212, 7
    %v214 = vsub.s32 3, %v213
    %v215 = vrot.slane %v55, %v214
    %v217 = vsel %vm153, %v52, 0
    %v220 = vsel %vm153, %v53, 0
    %v223 = vsel %vm153, %v54, 0
    %225 = vmatprep.subr.mxu0 0.0
    %226 = vmatpush1.msra.mxu0 0.0
    %227 = vmatprep.subr.mxu0 0.0
    %228 = vmatpush1.msra.mxu0 0.0
    %229 = vmatprep.subr.mxu0 0.0
    %230 = vmatpush1.msra.mxu0 0.0
    %231 = vmatprep.subr.mxu0 0.0
    %232 = vmatpush1.msra.mxu0 0.0
    %233 = vmatprep.subr.mxu0 0.0
    %234 = vmatpush1.msra.mxu0 0.0
    %235 = vmatprep.subr.mxu0 0.0
    %236 = vmatpush1.msra.mxu0 0.0
    %237 = vmatprep.subr.mxu0 0.0
    %238 = vmatpush1.msra.mxu0 0.0
    %239 = vmatprep.subr.mxu0 0.0
    %240 = vmatpush1.msra.mxu0 0.0
    %241 = vmatprep.subr.mxu0 0.0
    %242 = vmatpush1.msra.mxu0 0.0
    %243 = vmatprep.subr.mxu0 0.0
    %244 = vmatpush1.msra.mxu0 0.0
    %245 = vmatprep.subr.mxu0 0.0
    %246 = vmatpush1.msra.mxu0 0.0
    %247 = vmatprep.subr.mxu0 0.0
    %248 = vmatpush1.msra.mxu0 0.0
    %249 = vmatprep.subr.mxu0 0.0
    %250 = vmatpush1.msra.mxu0 %v211
    %251 = vmatprep.subr.mxu0 0.0
    %252 = vmatpush1.msra.mxu0 %v210
    %253 = vmatprep.subr.mxu0 0.0
    %254 = vmatpush1.msra.mxu0 %v209
    %255 = vmatprep.subr.mxu0 0.0
    %256 = vmatpush1.msra.mxu0 %v208
    %257 = vmatprep.subr.mxu0 0.0
    %258 = vmatpush2.msra.mxu0 0.0
    %259 = vmatprep.subr.mxu0 0.0
    %260 = vmatpush2.msra.mxu0 0.0
    %261 = vmatprep.subr.mxu0 0.0
    %262 = vmatpush2.msra.mxu0 0.0
    %263 = vmatprep.subr.mxu0 0.0
    %264 = vmatpush2.msra.mxu0 0.0
    %265 = vmatprep.subr.mxu0 0.0
    %266 = vmatpush2.msra.mxu0 0.0
    %267 = vmatprep.subr.mxu0 0.0
    %268 = vmatpush2.msra.mxu0 0.0
    %269 = vmatprep.subr.mxu0 0.0
    %270 = vmatpush2.msra.mxu0 0.0
    %271 = vmatprep.subr.mxu0 0.0
    %272 = vmatpush2.msra.mxu0 0.0
    %273 = vmatprep.subr.mxu0 0.0
    %274 = vmatpush2.msra.mxu0 0.0
    %275 = vmatprep.subr.mxu0 0.0
    %276 = vmatpush2.msra.mxu0 0.0
    %277 = vmatprep.subr.mxu0 0.0
    %278 = vmatpush2.msra.mxu0 0.0
    %279 = vmatprep.subr.mxu0 0.0
    %280 = vmatpush2.msra.mxu0 0.0
    %281 = vmatprep.subr.mxu0 0.0
    %282 = vmatpush2.msra.mxu0 0.0
    %283 = vmatprep.subr.mxu0 0.0
    %284 = vmatpush2.msra.mxu0 0.0
    %285 = vmatprep.subr.mxu0 0.0
    %286 = vmatpush2.msra.mxu0 0.0
    %287 = vmatprep.subr.mxu0 0.0
    %288 = vmatpush2.msra.mxu0 0.0
    %289 = vmatprep.mubr.f32.mxu0 0.0
    %290 = vmatmul.mubr.f32.gmra.mxu0 %v217
    %v291 = vpop.f32.mrf.mxu0
    %v292 = vadd.f32 %v215, %v291
    %v293 = vpop.f32.mrf.mxu0
    %294 = vmatprep.mubr.f32.mxu0 0.0
    %295 = vmatmul.mubr.f32.gmra.mxu0 %v220
    %v296 = vpop.f32.mrf.mxu0
    %v297 = vadd.f32 %v215, %v296
    %v298 = vpop.f32.mrf.mxu0
    %299 = vmatprep.mubr.f32.mxu0 0.0
    %300 = vmatmul.mubr.f32.gmra.mxu0 %v223
    %v301 = vpop.f32.mrf.mxu0
    %v302 = vadd.f32 %v215, %v301
    %v303 = vpop.f32.mrf.mxu0
    %304 = vdwg.mxu0
    %v305 = vsel %vm153, %v292, 0.0
    %306 = vadd.xlane.f32.xlu0 %v305
    %v307 = vpop.xlane.xlu0 %306
    %v308 = vsel %vm153, %v297, 0.0
    %309 = vadd.xlane.f32.xlu0 %v308
    %v310 = vpop.xlane.xlu0 %309
    %v311 = vsel %vm153, %v302, 0.0
    %312 = vadd.xlane.f32.xlu0 %v311
    %v313 = vpop.xlane.xlu0 %312
    %v314 = vmul.f32 %v307, %v163
    %v315 = vmul.f32 %v310, %v163
    %v316 = vmul.f32 %v313, %v163
    %v317 = vsub.f32 %v292, %v314
    %v318 = vsub.f32 %v297, %v315
    %v319 = vsub.f32 %v302, %v316
    %v320 = vmul.f32 %v317, %v317
    %v321 = vmul.f32 %v318, %v318
    %v322 = vmul.f32 %v319, %v319
    %v323 = vsel %vm153, %v320, 0.0
    %324 = vadd.xlane.f32.xlu0 %v323
    %v325 = vpop.xlane.xlu0 %324
    %v326 = vsel %vm153, %v321, 0.0
    %327 = vadd.xlane.f32.xlu0 %v326
    %v328 = vpop.xlane.xlu0 %327
    %v329 = vsel %vm153, %v322, 0.0
    %330 = vadd.xlane.f32.xlu0 %v329
    %v331 = vpop.xlane.xlu0 %330
    %v332 = vmul.f32 %v325, %v163
    %v333 = vmul.f32 %v328, %v163
    %v334 = vmul.f32 %v331, %v163
    %v335 = vadd.f32 %v332, 1e-05
    %v336 = vadd.f32 %v333, 1e-05
    %v337 = vadd.f32 %v334, 1e-05
    %v338 = vrsqrt.pop %v335
    %v339 = vrsqrt.pop %v336
    %v340 = vrsqrt.pop %v337
    %v341 = vmul.f32 %v317, %v338
    %v342 = vmul.f32 %v318, %v339
    %v343 = vmul.f32 %v319, %v340
    %v344 = vlaneseq
    %v345 = vshrl.u32 %v344, 7
    %v346 = vsub.s32 4, %v345
    %v347 = vrot.slane %v55, %v346
    %v348 = vmul.f32 %v341, %v347
    %v349 = vmul.f32 %v342, %v347
    %v350 = vmul.f32 %v343, %v347
    %v351 = vlaneseq
    %v352 = vshrl.u32 %v351, 7
    %v353 = vsub.s32 5, %v352
    %v354 = vrot.slane %v55, %v353
    %v355 = vadd.f32 %v348, %v354
    %v356 = vadd.f32 %v349, %v354
    %v357 = vadd.f32 %v350, %v354
    %v358 = vadd.f32 %v205, %v355
    %v359 = vadd.f32 %v206, %v356
    %v360 = vadd.f32 %v207, %v357
    %v361 = vmul.f32 %v358, 0.5
    %v362 = vmul.f32 %v359, 0.5
    %v363 = vmul.f32 %v360, 0.5
    %v364 = vtanh.pop %v361
    %v365 = vtanh.pop %v362
    %v366 = vtanh.pop %v363
    %v367 = vmul.f32 %v364, 0.5
    %v368 = vmul.f32 %v365, 0.5
    %v369 = vmul.f32 %v366, 0.5
    %v370 = vadd.f32 %v367, 0.5
    %v371 = vadd.f32 %v368, 0.5
    %v372 = vadd.f32 %v369, 0.5
    %s373 = scalar_lea.vmem [#allocation2], 32
    %v374 = vld [vmem:[%s373] sm:$0xff]
    %v375 = vld [vmem:[%s373 + $0x8] sm:$0xff]
    %v376 = vld [vmem:[%s373 + $0x10] sm:$0xff]
    %v377 = vld [vmem:[%s373 + $0x18] sm:$0xff]
    %v378 = vlaneseq
    %v379 = vshrl.u32 %v378, 7
    %v380 = vsub.s32 6, %v379
    %v381 = vrot.slane %v55, %v380
    %v383 = vsel %vm153, %v370, 0
    %v386 = vsel %vm153, %v371, 0
    %v389 = vsel %vm153, %v372, 0
    %391 = vmatprep.subr.mxu0 0.0
    %392 = vmatpush1.msra.mxu0 0.0
    %393 = vmatprep.subr.mxu0 0.0
    %394 = vmatpush1.msra.mxu0 0.0
    %395 = vmatprep.subr.mxu0 0.0
    %396 = vmatpush1.msra.mxu0 0.0
    %397 = vmatprep.subr.mxu0 0.0
    %398 = vmatpush1.msra.mxu0 0.0
    %399 = vmatprep.subr.mxu0 0.0
    %400 = vmatpush1.msra.mxu0 0.0
    %401 = vmatprep.subr.mxu0 0.0
    %402 = vmatpush1.msra.mxu0 0.0
    %403 = vmatprep.subr.mxu0 0.0
    %404 = vmatpush1.msra.mxu0 0.0
    %405 = vmatprep.subr.mxu0 0.0
    %406 = vmatpush1.msra.mxu0 0.0
    %407 = vmatprep.subr.mxu0 0.0
    %408 = vmatpush1.msra.mxu0 0.0
    %409 = vmatprep.subr.mxu0 0.0
    %410 = vmatpush1.msra.mxu0 0.0
    %411 = vmatprep.subr.mxu0 0.0
    %412 = vmatpush1.msra.mxu0 0.0
    %413 = vmatprep.subr.mxu0 0.0
    %414 = vmatpush1.msra.mxu0 0.0
    %415 = vmatprep.subr.mxu0 0.0
    %416 = vmatpush1.msra.mxu0 %v377
    %417 = vmatprep.subr.mxu0 0.0
    %418 = vmatpush1.msra.mxu0 %v376
    %419 = vmatprep.subr.mxu0 0.0
    %420 = vmatpush1.msra.mxu0 %v375
    %421 = vmatprep.subr.mxu0 0.0
    %422 = vmatpush1.msra.mxu0 %v374
    %423 = vmatprep.subr.mxu0 0.0
    %424 = vmatpush2.msra.mxu0 0.0
    %425 = vmatprep.subr.mxu0 0.0
    %426 = vmatpush2.msra.mxu0 0.0
    %427 = vmatprep.subr.mxu0 0.0
    %428 = vmatpush2.msra.mxu0 0.0
    %429 = vmatprep.subr.mxu0 0.0
    %430 = vmatpush2.msra.mxu0 0.0
    %431 = vmatprep.subr.mxu0 0.0
    %432 = vmatpush2.msra.mxu0 0.0
    %433 = vmatprep.subr.mxu0 0.0
    %434 = vmatpush2.msra.mxu0 0.0
    %435 = vmatprep.subr.mxu0 0.0
    %436 = vmatpush2.msra.mxu0 0.0
    %437 = vmatprep.subr.mxu0 0.0
    %438 = vmatpush2.msra.mxu0 0.0
    %439 = vmatprep.subr.mxu0 0.0
    %440 = vmatpush2.msra.mxu0 0.0
    %441 = vmatprep.subr.mxu0 0.0
    %442 = vmatpush2.msra.mxu0 0.0
    %443 = vmatprep.subr.mxu0 0.0
    %444 = vmatpush2.msra.mxu0 0.0
    %445 = vmatprep.subr.mxu0 0.0
    %446 = vmatpush2.msra.mxu0 0.0
    %447 = vmatprep.subr.mxu0 0.0
    %448 = vmatpush2.msra.mxu0 0.0
    %449 = vmatprep.subr.mxu0 0.0
    %450 = vmatpush2.msra.mxu0 0.0
    %451 = vmatprep.subr.mxu0 0.0
    %452 = vmatpush2.msra.mxu0 0.0
    %453 = vmatprep.subr.mxu0 0.0
    %454 = vmatpush2.msra.mxu0 0.0
    %455 = vmatprep.mubr.f32.mxu0 0.0
    %456 = vmatmul.mubr.f32.gmra.mxu0 %v383
    %v457 = vpop.f32.mrf.mxu0
    %v458 = vadd.f32 %v381, %v457
    %v459 = vpop.f32.mrf.mxu0
    %460 = vmatprep.mubr.f32.mxu0 0.0
    %461 = vmatmul.mubr.f32.gmra.mxu0 %v386
    %v462 = vpop.f32.mrf.mxu0
    %v463 = vadd.f32 %v381, %v462
    %v464 = vpop.f32.mrf.mxu0
    %465 = vmatprep.mubr.f32.mxu0 0.0
    %466 = vmatmul.mubr.f32.gmra.mxu0 %v389
    %v467 = vpop.f32.mrf.mxu0
    %v468 = vadd.f32 %v381, %v467
    %v469 = vpop.f32.mrf.mxu0
    %470 = vdwg.mxu0
    %v471 = vsel %vm153, %v458, 0.0
    %472 = vadd.xlane.f32.xlu0 %v471
    %v473 = vpop.xlane.xlu0 %472
    %v474 = vsel %vm153, %v463, 0.0
    %475 = vadd.xlane.f32.xlu0 %v474
    %v476 = vpop.xlane.xlu0 %475
    %v477 = vsel %vm153, %v468, 0.0
    %478 = vadd.xlane.f32.xlu0 %v477
    %v479 = vpop.xlane.xlu0 %478
    %v480 = vmul.f32 %v473, %v163
    %v481 = vmul.f32 %v476, %v163
    %v482 = vmul.f32 %v479, %v163
    %v483 = vsub.f32 %v458, %v480
    %v484 = vsub.f32 %v463, %v481
    %v485 = vsub.f32 %v468, %v482
    %v486 = vmul.f32 %v483, %v483
    %v487 = vmul.f32 %v484, %v484
    %v488 = vmul.f32 %v485, %v485
    %v489 = vsel %vm153, %v486, 0.0
    %490 = vadd.xlane.f32.xlu0 %v489
    %v491 = vpop.xlane.xlu0 %490
    %v492 = vsel %vm153, %v487, 0.0
    %493 = vadd.xlane.f32.xlu0 %v492
    %v494 = vpop.xlane.xlu0 %493
    %v495 = vsel %vm153, %v488, 0.0
    %496 = vadd.xlane.f32.xlu0 %v495
    %v497 = vpop.xlane.xlu0 %496
    %v498 = vmul.f32 %v491, %v163
    %v499 = vmul.f32 %v494, %v163
    %v500 = vmul.f32 %v497, %v163
    %v501 = vadd.f32 %v498, 1e-05
    %v502 = vadd.f32 %v499, 1e-05
    %v503 = vadd.f32 %v500, 1e-05
    %v504 = vrsqrt.pop %v501
    %v505 = vrsqrt.pop %v502
    %v506 = vrsqrt.pop %v503
    %v507 = vmul.f32 %v483, %v504
    %v508 = vmul.f32 %v484, %v505
    %v509 = vmul.f32 %v485, %v506
    %v510 = vlaneseq
    %v511 = vshrl.u32 %v510, 7
    %v512 = vsub.s32 7, %v511
    %v513 = vrot.slane %v55, %v512
    %v514 = vmul.f32 %v507, %v513
    %v515 = vmul.f32 %v508, %v513
    %v516 = vmul.f32 %v509, %v513
    %v517 = vlaneseq
    %v518 = vshrl.u32 %v517, 7
    %v519 = vsub.s32 0, %v518
    %v520 = vrot.slane %v56, %v519
    %v521 = vadd.f32 %v514, %v520
    %v522 = vadd.f32 %v515, %v520
    %v523 = vadd.f32 %v516, %v520
    %v524 = vadd.f32 %v358, %v521
    %v525 = vadd.f32 %v359, %v522
    %v526 = vadd.f32 %v360, %v523
    %v527 = vmul.f32 %v524, 0.5
    %v528 = vmul.f32 %v525, 0.5
    %v529 = vmul.f32 %v526, 0.5
    %v530 = vtanh.pop %v527
    %v531 = vtanh.pop %v528
    %v532 = vtanh.pop %v529
    %v533 = vmul.f32 %v530, 0.5
    %v534 = vmul.f32 %v531, 0.5
    %v535 = vmul.f32 %v532, 0.5
    %v536 = vadd.f32 %v533, 0.5
    %v537 = vadd.f32 %v534, 0.5
    %v538 = vadd.f32 %v535, 0.5
    %s539 = scalar_lea.vmem [#allocation2], 64
    %v540 = vld [vmem:[%s539] sm:$0xff]
    %v541 = vld [vmem:[%s539 + $0x8] sm:$0xff]
    %v542 = vld [vmem:[%s539 + $0x10] sm:$0xff]
    %v543 = vld [vmem:[%s539 + $0x18] sm:$0xff]
    %v544 = vlaneseq
    %v545 = vshrl.u32 %v544, 7
    %v546 = vsub.s32 1, %v545
    %v547 = vrot.slane %v56, %v546
    %v549 = vsel %vm153, %v536, 0
    %v552 = vsel %vm153, %v537, 0
    %v555 = vsel %vm153, %v538, 0
    %557 = vmatprep.subr.mxu0 0.0
    %558 = vmatpush1.msra.mxu0 0.0
    %559 = vmatprep.subr.mxu0 0.0
    %560 = vmatpush1.msra.mxu0 0.0
    %561 = vmatprep.subr.mxu0 0.0
    %562 = vmatpush1.msra.mxu0 0.0
    %563 = vmatprep.subr.mxu0 0.0
    %564 = vmatpush1.msra.mxu0 0.0
    %565 = vmatprep.subr.mxu0 0.0
    %566 = vmatpush1.msra.mxu0 0.0
    %567 = vmatprep.subr.mxu0 0.0
    %568 = vmatpush1.msra.mxu0 0.0
    %569 = vmatprep.subr.mxu0 0.0
    %570 = vmatpush1.msra.mxu0 0.0
    %571 = vmatprep.subr.mxu0 0.0
    %572 = vmatpush1.msra.mxu0 0.0
    %573 = vmatprep.subr.mxu0 0.0
    %574 = vmatpush1.msra.mxu0 0.0
    %575 = vmatprep.subr.mxu0 0.0
    %576 = vmatpush1.msra.mxu0 0.0
    %577 = vmatprep.subr.mxu0 0.0
    %578 = vmatpush1.msra.mxu0 0.0
    %579 = vmatprep.subr.mxu0 0.0
    %580 = vmatpush1.msra.mxu0 0.0
    %581 = vmatprep.subr.mxu0 0.0
    %582 = vmatpush1.msra.mxu0 %v543
    %583 = vmatprep.subr.mxu0 0.0
    %584 = vmatpush1.msra.mxu0 %v542
    %585 = vmatprep.subr.mxu0 0.0
    %586 = vmatpush1.msra.mxu0 %v541
    %587 = vmatprep.subr.mxu0 0.0
    %588 = vmatpush1.msra.mxu0 %v540
    %589 = vmatprep.subr.mxu0 0.0
    %590 = vmatpush2.msra.mxu0 0.0
    %591 = vmatprep.subr.mxu0 0.0
    %592 = vmatpush2.msra.mxu0 0.0
    %593 = vmatprep.subr.mxu0 0.0
    %594 = vmatpush2.msra.mxu0 0.0
    %595 = vmatprep.subr.mxu0 0.0
    %596 = vmatpush2.msra.mxu0 0.0
    %597 = vmatprep.subr.mxu0 0.0
    %598 = vmatpush2.msra.mxu0 0.0
    %599 = vmatprep.subr.mxu0 0.0
    %600 = vmatpush2.msra.mxu0 0.0
    %601 = vmatprep.subr.mxu0 0.0
    %602 = vmatpush2.msra.mxu0 0.0
    %603 = vmatprep.subr.mxu0 0.0
    %604 = vmatpush2.msra.mxu0 0.0
    %605 = vmatprep.subr.mxu0 0.0
    %606 = vmatpush2.msra.mxu0 0.0
    %607 = vmatprep.subr.mxu0 0.0
    %608 = vmatpush2.msra.mxu0 0.0
    %609 = vmatprep.subr.mxu0 0.0
    %610 = vmatpush2.msra.mxu0 0.0
    %611 = vmatprep.subr.mxu0 0.0
    %612 = vmatpush2.msra.mxu0 0.0
    %613 = vmatprep.subr.mxu0 0.0
    %614 = vmatpush2.msra.mxu0 0.0
    %615 = vmatprep.subr.mxu0 0.0
    %616 = vmatpush2.msra.mxu0 0.0
    %617 = vmatprep.subr.mxu0 0.0
    %618 = vmatpush2.msra.mxu0 0.0
    %619 = vmatprep.subr.mxu0 0.0
    %620 = vmatpush2.msra.mxu0 0.0
    %621 = vmatprep.mubr.f32.mxu0 0.0
    %622 = vmatmul.mubr.f32.gmra.mxu0 %v549
    %v623 = vpop.f32.mrf.mxu0
    %v624 = vadd.f32 %v547, %v623
    %v625 = vpop.f32.mrf.mxu0
    %626 = vmatprep.mubr.f32.mxu0 0.0
    %627 = vmatmul.mubr.f32.gmra.mxu0 %v552
    %v628 = vpop.f32.mrf.mxu0
    %v629 = vadd.f32 %v547, %v628
    %v630 = vpop.f32.mrf.mxu0
    %631 = vmatprep.mubr.f32.mxu0 0.0
    %632 = vmatmul.mubr.f32.gmra.mxu0 %v555
    %v633 = vpop.f32.mrf.mxu0
    %v634 = vadd.f32 %v547, %v633
    %v635 = vpop.f32.mrf.mxu0
    %636 = vdwg.mxu0
    %v637 = vsel %vm153, %v624, 0.0
    %638 = vadd.xlane.f32.xlu0 %v637
    %v639 = vpop.xlane.xlu0 %638
    %v640 = vsel %vm153, %v629, 0.0
    %641 = vadd.xlane.f32.xlu0 %v640
    %v642 = vpop.xlane.xlu0 %641
    %v643 = vsel %vm153, %v634, 0.0
    %644 = vadd.xlane.f32.xlu0 %v643
    %v645 = vpop.xlane.xlu0 %644
    %v646 = vmul.f32 %v639, %v163
    %v647 = vmul.f32 %v642, %v163
    %v648 = vmul.f32 %v645, %v163
    %v649 = vsub.f32 %v624, %v646
    %v650 = vsub.f32 %v629, %v647
    %v651 = vsub.f32 %v634, %v648
    %v652 = vmul.f32 %v649, %v649
    %v653 = vmul.f32 %v650, %v650
    %v654 = vmul.f32 %v651, %v651
    %v655 = vsel %vm153, %v652, 0.0
    %656 = vadd.xlane.f32.xlu0 %v655
    %v657 = vpop.xlane.xlu0 %656
    %v658 = vsel %vm153, %v653, 0.0
    %659 = vadd.xlane.f32.xlu0 %v658
    %v660 = vpop.xlane.xlu0 %659
    %v661 = vsel %vm153, %v654, 0.0
    %662 = vadd.xlane.f32.xlu0 %v661
    %v663 = vpop.xlane.xlu0 %662
    %v664 = vmul.f32 %v657, %v163
    %v665 = vmul.f32 %v660, %v163
    %v666 = vmul.f32 %v663, %v163
    %v667 = vadd.f32 %v664, 1e-05
    %v668 = vadd.f32 %v665, 1e-05
    %v669 = vadd.f32 %v666, 1e-05
    %v670 = vrsqrt.pop %v667
    %v671 = vrsqrt.pop %v668
    %v672 = vrsqrt.pop %v669
    %v673 = vmul.f32 %v649, %v670
    %v674 = vmul.f32 %v650, %v671
    %v675 = vmul.f32 %v651, %v672
    %v676 = vlaneseq
    %v677 = vshrl.u32 %v676, 7
    %v678 = vsub.s32 2, %v677
    %v679 = vrot.slane %v56, %v678
    %v680 = vmul.f32 %v673, %v679
    %v681 = vmul.f32 %v674, %v679
    %v682 = vmul.f32 %v675, %v679
    %v683 = vlaneseq
    %v684 = vshrl.u32 %v683, 7
    %v685 = vsub.s32 3, %v684
    %v686 = vrot.slane %v56, %v685
    %v687 = vadd.f32 %v680, %v686
    %v688 = vadd.f32 %v681, %v686
    %v689 = vadd.f32 %v682, %v686
    %v690 = vadd.f32 %v524, %v687
    %v691 = vadd.f32 %v525, %v688
    %v692 = vadd.f32 %v526, %v689
    %v693 = vmul.f32 %v690, 0.5
    %v694 = vmul.f32 %v691, 0.5
    %v695 = vmul.f32 %v692, 0.5
    %v696 = vtanh.pop %v693
    %v697 = vtanh.pop %v694
    %v698 = vtanh.pop %v695
    %v699 = vmul.f32 %v696, 0.5
    %v700 = vmul.f32 %v697, 0.5
    %v701 = vmul.f32 %v698, 0.5
    %v702 = vadd.f32 %v699, 0.5
    %v703 = vadd.f32 %v700, 0.5
    %v704 = vadd.f32 %v701, 0.5
    %s705 = scalar_lea.vmem [#allocation2], 96
    %v706 = vld [vmem:[%s705] sm:$0xff]
    %v707 = vld [vmem:[%s705 + $0x8] sm:$0xff]
    %v708 = vld [vmem:[%s705 + $0x10] sm:$0xff]
    %v709 = vld [vmem:[%s705 + $0x18] sm:$0xff]
    %v710 = vlaneseq
    %v711 = vshrl.u32 %v710, 7
    %v712 = vsub.s32 4, %v711
    %v713 = vrot.slane %v56, %v712
    %v715 = vsel %vm153, %v702, 0
    %v718 = vsel %vm153, %v703, 0
    %v721 = vsel %vm153, %v704, 0
    %723 = vmatprep.subr.mxu0 0.0
    %724 = vmatpush1.msra.mxu0 0.0
    %725 = vmatprep.subr.mxu0 0.0
    %726 = vmatpush1.msra.mxu0 0.0
    %727 = vmatprep.subr.mxu0 0.0
    %728 = vmatpush1.msra.mxu0 0.0
    %729 = vmatprep.subr.mxu0 0.0
    %730 = vmatpush1.msra.mxu0 0.0
    %731 = vmatprep.subr.mxu0 0.0
    %732 = vmatpush1.msra.mxu0 0.0
    %733 = vmatprep.subr.mxu0 0.0
    %734 = vmatpush1.msra.mxu0 0.0
    %735 = vmatprep.subr.mxu0 0.0
    %736 = vmatpush1.msra.mxu0 0.0
    %737 = vmatprep.subr.mxu0 0.0
    %738 = vmatpush1.msra.mxu0 0.0
    %739 = vmatprep.subr.mxu0 0.0
    %740 = vmatpush1.msra.mxu0 0.0
    %741 = vmatprep.subr.mxu0 0.0
    %742 = vmatpush1.msra.mxu0 0.0
    %743 = vmatprep.subr.mxu0 0.0
    %744 = vmatpush1.msra.mxu0 0.0
    %745 = vmatprep.subr.mxu0 0.0
    %746 = vmatpush1.msra.mxu0 0.0
    %747 = vmatprep.subr.mxu0 0.0
    %748 = vmatpush1.msra.mxu0 %v709
    %749 = vmatprep.subr.mxu0 0.0
    %750 = vmatpush1.msra.mxu0 %v708
    %751 = vmatprep.subr.mxu0 0.0
    %752 = vmatpush1.msra.mxu0 %v707
    %753 = vmatprep.subr.mxu0 0.0
    %754 = vmatpush1.msra.mxu0 %v706
    %755 = vmatprep.subr.mxu0 0.0
    %756 = vmatpush2.msra.mxu0 0.0
    %757 = vmatprep.subr.mxu0 0.0
    %758 = vmatpush2.msra.mxu0 0.0
    %759 = vmatprep.subr.mxu0 0.0
    %760 = vmatpush2.msra.mxu0 0.0
    %761 = vmatprep.subr.mxu0 0.0
    %762 = vmatpush2.msra.mxu0 0.0
    %763 = vmatprep.subr.mxu0 0.0
    %764 = vmatpush2.msra.mxu0 0.0
    %765 = vmatprep.subr.mxu0 0.0
    %766 = vmatpush2.msra.mxu0 0.0
    %767 = vmatprep.subr.mxu0 0.0
    %768 = vmatpush2.msra.mxu0 0.0
    %769 = vmatprep.subr.mxu0 0.0
    %770 = vmatpush2.msra.mxu0 0.0
    %771 = vmatprep.subr.mxu0 0.0
    %772 = vmatpush2.msra.mxu0 0.0
    %773 = vmatprep.subr.mxu0 0.0
    %774 = vmatpush2.msra.mxu0 0.0
    %775 = vmatprep.subr.mxu0 0.0
    %776 = vmatpush2.msra.mxu0 0.0
    %777 = vmatprep.subr.mxu0 0.0
    %778 = vmatpush2.msra.mxu0 0.0
    %779 = vmatprep.subr.mxu0 0.0
    %780 = vmatpush2.msra.mxu0 0.0
    %781 = vmatprep.subr.mxu0 0.0
    %782 = vmatpush2.msra.mxu0 0.0
    %783 = vmatprep.subr.mxu0 0.0
    %784 = vmatpush2.msra.mxu0 0.0
    %785 = vmatprep.subr.mxu0 0.0
    %786 = vmatpush2.msra.mxu0 0.0
    %787 = vmatprep.mubr.f32.mxu0 0.0
    %788 = vmatmul.mubr.f32.gmra.mxu0 %v715
    %v789 = vpop.f32.mrf.mxu0
    %v790 = vadd.f32 %v713, %v789
    %v791 = vpop.f32.mrf.mxu0
    %792 = vmatprep.mubr.f32.mxu0 0.0
    %793 = vmatmul.mubr.f32.gmra.mxu0 %v718
    %v794 = vpop.f32.mrf.mxu0
    %v795 = vadd.f32 %v713, %v794
    %v796 = vpop.f32.mrf.mxu0
    %797 = vmatprep.mubr.f32.mxu0 0.0
    %798 = vmatmul.mubr.f32.gmra.mxu0 %v721
    %v799 = vpop.f32.mrf.mxu0
    %v800 = vadd.f32 %v713, %v799
    %v801 = vpop.f32.mrf.mxu0
    %802 = vdwg.mxu0
    %v803 = vsel %vm153, %v790, 0.0
    %804 = vadd.xlane.f32.xlu0 %v803
    %v805 = vpop.xlane.xlu0 %804
    %v806 = vsel %vm153, %v795, 0.0
    %807 = vadd.xlane.f32.xlu0 %v806
    %v808 = vpop.xlane.xlu0 %807
    %v809 = vsel %vm153, %v800, 0.0
    %810 = vadd.xlane.f32.xlu0 %v809
    %v811 = vpop.xlane.xlu0 %810
    %v812 = vmul.f32 %v805, %v163
    %v813 = vmul.f32 %v808, %v163
    %v814 = vmul.f32 %v811, %v163
    %v815 = vsub.f32 %v790, %v812
    %v816 = vsub.f32 %v795, %v813
    %v817 = vsub.f32 %v800, %v814
    %v818 = vmul.f32 %v815, %v815
    %v819 = vmul.f32 %v816, %v816
    %v820 = vmul.f32 %v817, %v817
    %v821 = vsel %vm153, %v818, 0.0
    %822 = vadd.xlane.f32.xlu0 %v821
    %v823 = vpop.xlane.xlu0 %822
    %v824 = vsel %vm153, %v819, 0.0
    %825 = vadd.xlane.f32.xlu0 %v824
    %v826 = vpop.xlane.xlu0 %825
    %v827 = vsel %vm153, %v820, 0.0
    %828 = vadd.xlane.f32.xlu0 %v827
    %v829 = vpop.xlane.xlu0 %828
    %v830 = vmul.f32 %v823, %v163
    %v831 = vmul.f32 %v826, %v163
    %v832 = vmul.f32 %v829, %v163
    %v833 = vadd.f32 %v830, 1e-05
    %v834 = vadd.f32 %v831, 1e-05
    %v835 = vadd.f32 %v832, 1e-05
    %v836 = vrsqrt.pop %v833
    %v837 = vrsqrt.pop %v834
    %v838 = vrsqrt.pop %v835
    %v839 = vmul.f32 %v815, %v836
    %v840 = vmul.f32 %v816, %v837
    %v841 = vmul.f32 %v817, %v838
    %v842 = vlaneseq
    %v843 = vshrl.u32 %v842, 7
    %v844 = vsub.s32 5, %v843
    %v845 = vrot.slane %v56, %v844
    %v846 = vmul.f32 %v839, %v845
    %v847 = vmul.f32 %v840, %v845
    %v848 = vmul.f32 %v841, %v845
    %v849 = vlaneseq
    %v850 = vshrl.u32 %v849, 7
    %v851 = vsub.s32 6, %v850
    %v852 = vrot.slane %v56, %v851
    %v853 = vadd.f32 %v846, %v852
    %v854 = vadd.f32 %v847, %v852
    %v855 = vadd.f32 %v848, %v852
    %v856 = vadd.f32 %v690, %v853
    %v857 = vadd.f32 %v691, %v854
    %v858 = vadd.f32 %v692, %v855
    %v859 = vmul.f32 %v856, 0.5
    %v860 = vmul.f32 %v857, 0.5
    %v861 = vmul.f32 %v858, 0.5
    %v862 = vtanh.pop %v859
    %v863 = vtanh.pop %v860
    %v864 = vtanh.pop %v861
    %v865 = vmul.f32 %v862, 0.5
    %v866 = vmul.f32 %v863, 0.5
    %v867 = vmul.f32 %v864, 0.5
    %v868 = vadd.f32 %v865, 0.5
    %v869 = vadd.f32 %v866, 0.5
    %v870 = vadd.f32 %v867, 0.5
    %871 = vst.msk [vmem:[#allocation7] sm:$0xff] %vm153, %v868
    %872 = vst.msk [vmem:[#allocation7 + $0x8] sm:$0xff] %vm153, %v869
    %873 = vst.msk [vmem:[#allocation7 + $0x10] sm:$0xff] %vm153, %v870
    // Predicated region
    $region30: #{tpu_custom_call.1} parent=1 // pred_check
      _
    $region31: #{tpu_custom_call.1} parent=1 // pred_check_branch
      %875 = sbr.rel (0) target = $region33
    $region32: #{tpu_custom_call.1} parent=1 // pred_region
      %s877 = ssub.s32 384, 384
      %878 = vsyncadd [#allocation4], %s877
      %s879 = sshll.u32 [#allocation7], 4
      %s880 = int_to_ptr.vmem [resolvable:$true] %s879
      %885 = dma.vmem_to_hbm [thread:$0]  %s880, 384, %s5, [#allocation4], 128, 128, 8
    $region33: #{tpu_custom_call.1} parent=1 // pred_fallthru
      _
    // Predicated region
    $region34: #{tpu_custom_call.1} parent=1 // pred_check
      _
    $region35: #{tpu_custom_call.1} parent=1 // pred_check_branch
      %887 = sbr.rel (0) target = $region37
    $region36: #{tpu_custom_call.1} parent=1 // pred_region
      %888 = dma.done [#allocation4], 384
    $region37: #{tpu_custom_call.1} parent=1 // pred_fallthru
      _
    %889 = vsyncpa [#allocation3], 1
    %890 = vsyncpa [#allocation6], 1
    %891 = vsyncpa [#allocation4], 1

</llo_original>
